<compile_context>
chip_gen: v6e
topology: v6e:2x2x1
jax: 0.10.0
libtpu: 0.0.40
codegen_flags: <defaults>
</compile_context>

<pallas_src>
import math
import functools

import jax
import jax.numpy as jnp
from jax.experimental import pallas as pl
from jax.experimental.pallas import tpu as pltpu


# ---------------------------------------------------------------------------
# Pallas kernel: DMA row gather (ids in SMEM, table in HBM, output in VMEM)
# ---------------------------------------------------------------------------
def _gather_tile_kernel(ids_ref, table_hbm, out_ref, buf, sems, *, tile_b):
    """Gather tile_b rows of an HBM table (selected by SMEM ids) into one block."""
    base = pl.program_id(0) * tile_b
    copies = []
    # Issue all row DMAs first so up to tile_b transfers are in flight at once.
    for r in range(tile_b):                           # static unroll (tile_b <= 128)
        row = ids_ref[base + r]                       # cheap scalar read from SMEM
        cp = pltpu.make_async_copy(
            table_hbm.at[pl.ds(row, 1), :],           # (1, D) row in HBM
            buf.at[pl.ds(r, 1), :],                   # (1, D) slot in VMEM scratch
            sems.at[r],
        )
        cp.start()
        copies.append(cp)
    for cp in copies:
        cp.wait()
    out_ref[...] = buf[...]                           # lane/sublane-dense store


def _pallas_embed_lookup(table, ids, *, tile_b):
    n, d = table.shape
    b = int(ids.shape[0])
    padded_b = -(-b // tile_b) * tile_b
    # Defensive clip: out-of-range ids would make the DMA read a wrong row/fault.
    ids32 = jnp.clip(ids.astype(jnp.int32), 0, n - 1)
    if padded_b != b:
        # Pad with row 0 (always valid); padded rows are dropped below.
        ids32 = jnp.concatenate([ids32, jnp.zeros((padded_b - b,), jnp.int32)])

    kernel = functools.partial(_gather_tile_kernel, tile_b=tile_b)
    out = pl.pallas_call(
        kernel,
        out_shape=jax.ShapeDtypeStruct((padded_b, d), table.dtype),
        grid_spec=pltpu.PrefetchScalarGridSpec(
            num_scalar_prefetch=1,                    # ids -> SMEM
            grid=(padded_b // tile_b,),
            in_specs=[pl.BlockSpec(memory_space=pl.ANY)],   # table stays in HBM
            out_specs=pl.BlockSpec((tile_b, d), lambda i, ids: (i, 0)),
            scratch_shapes=[
                pltpu.VMEM((tile_b, d), table.dtype),       # gather landing buffer
                pltpu.SemaphoreType.DMA((tile_b,)),
            ],
        ),
        compiler_params=pltpu.CompilerParams(
            dimension_semantics=("parallel",),        # lets v7x split the batch across 2 TCs
        ),
    )(ids32, table)
    return out[:b] if padded_b != b else out


@functools.partial(jax.jit, static_argnames=("tile_b",))
def _fused_lookup(table, ids, *, tile_b):
    return _pallas_embed_lookup(table, ids, tile_b=tile_b)


def pallas_embed_lookup(table, ids, *, tile_b=None):
    """Gather rows `table[ids]` with a Pallas TPU DMA-gather kernel."""
    b = int(ids.shape[0])
    if tile_b is None:
        tile_b = 128 if b >= 128 else 8
    return _fused_lookup(table, ids, tile_b=tile_b)


# ---------------------------------------------------------------------------
# Module-equivalent wrapper
# ---------------------------------------------------------------------------
def xavier_uniform(key, shape, gain):
    # matches nn.init.xavier_uniform_ on a 2-D tensor: fan_out = shape[0], fan_in = shape[1]
    fan_out, fan_in = shape
    a = gain * math.sqrt(6.0 / (fan_in + fan_out))
    return jax.random.uniform(key, shape, dtype=jnp.float32, minval=-a, maxval=a)


class RelGraphEmbed:
    """Embedding layer for a featureless heterograph (JAX/Pallas version)."""

    def __init__(self, ntype_num_nodes, embed_size, key, activation=None, dropout=0.0):
        self.embed_size = embed_size
        self.activation = activation      # declared but never applied in forward() (matches PyTorch)
        self.dropout = dropout            # declared but never applied in forward() (matches PyTorch)
        gain = math.sqrt(2.0)             # nn.init.calculate_gain('relu')
        self.ntypes = sorted(ntype_num_nodes)
        self.num_nodes = {nt: int(ntype_num_nodes[nt]) for nt in self.ntypes}
        keys = jax.random.split(key, len(self.ntypes))
        tables, offsets, off = [], {}, 0
        for k, nt in zip(keys, self.ntypes):
            n = self.num_nodes[nt]
            tables.append(xavier_uniform(k, (n, embed_size), gain))
            offsets[nt] = off
            off += n
        # One stacked table so a mini-batch of lookups over all ntypes is a
        # single fused Pallas gather (amortizes launch/DMA-setup overhead).
        self._stacked = jnp.concatenate(tables, axis=0)
        self._offsets = offsets

    @property
    def embeds(self):
        out = {}
        for nt in self.ntypes:
            off, n = self._offsets[nt], self.num_nodes[nt]
            out[nt] = self._stacked[off:off + n]
        return out

    def forward(self, input_nodes=None):
        # Exact PyTorch semantics: with no block, return the embedding dict.
        if input_nodes is None:
            return self.embeds
        # Downstream usage (extract_embed): one fused Pallas DMA gather over the
        # stacked table, then split back per ntype.
        ntypes = [nt for nt in self.ntypes if nt in input_nodes]
        sizes = [int(jnp.shape(input_nodes[nt])[0]) for nt in ntypes]
        fused_ids = jnp.concatenate(
            [jnp.asarray(input_nodes[nt], jnp.int32) + self._offsets[nt] for nt in ntypes]
        )
        gathered = pallas_embed_lookup(self._stacked, fused_ids)
        out, start = {}, 0
        for nt, sz in zip(ntypes, sizes):
            out[nt] = gathered[start:start + sz]
            start += sz
        return out


if __name__ == "__main__":
    key = jax.random.PRNGKey(0)
    k_params, k_ids = jax.random.split(key)

    # Small synthetic heterograph: node counts per ntype.
    ntype_num_nodes = {"user": 16, "item": 24, "tag": 32}
    embed_size = 128

    layer = RelGraphEmbed(ntype_num_nodes, embed_size, k_params)

    # forward() with no block: returns the parameter dict (sanity check shapes).
    embeds = layer.forward()
    for ntype, n in ntype_num_nodes.items():
        assert embeds[ntype].shape == (n, embed_size)

    # forward() with a "block": gather embeddings for sampled input nodes.
    # Unequal per-ntype batches exercise the padding path of the fused gather.
    batch_sizes = {"user": 6, "item": 8, "tag": 5}
    id_keys = jax.random.split(k_ids, len(ntype_num_nodes))
    input_nodes = {
        ntype: jax.random.randint(
            kk, (batch_sizes[ntype],), 0, ntype_num_nodes[ntype], dtype=jnp.int32
        )
        for kk, ntype in zip(id_keys, sorted(ntype_num_nodes))
    }

    out = layer.forward(input_nodes)
    out = jax.tree_util.tree_map(jax.block_until_ready, out)

    # Verify against plain-JAX gather (the DMA gather must be bit-exact).
    ref_tables = layer.forward()
    for ntype, ids in input_nodes.items():
        ref = jnp.take(ref_tables[ntype], ids, axis=0)
        assert out[ntype].shape == (batch_sizes[ntype], embed_size)
        assert out[ntype].dtype == jnp.float32
        assert jnp.array_equal(out[ntype], ref), f"mismatch for {ntype}"

    print("KERNEL_OK")
</pallas_src>

<mosaic_0001>
module attributes {stable_mosaic.version = 11 : i64} {
  func.func @_gather_tile_kernel(%arg0: i32, %arg1: memref<24xi32, #tpu.memory_space<smem>>, %arg2: memref<72x128xf32, #tpu.memory_space<any>>, %arg3: memref<8x128xf32, #tpu.memory_space<vmem>>, %arg4: memref<8x128xf32, #tpu.memory_space<vmem>>, %arg5: memref<8x!tpu.dma_semaphore, #tpu.memory_space<semaphore_mem>>) attributes {dimension_semantics = [#tpu.dimension_semantics<parallel>], iteration_bounds = array<i64: 3>, scalar_prefetch = 1 : i64, scratch_operands = 2 : i64, tpu.core_type = #tpu.core_type<tc>, window_params = [{}, {transform_indices = @transform_1, window_bounds = array<i64: 8, 128>}]} {
    %c8_i32 = arith.constant 8 : i32
    %0 = arith.muli %arg0, %c8_i32 : i32
    %c0_i32 = arith.constant 0 : i32
    %1 = arith.addi %0, %c0_i32 : i32
    %2 = arith.index_cast %1 : i32 to index
    %3 = memref.load %arg1[%2] : memref<24xi32, #tpu.memory_space<smem>>
    %c0_i32_0 = arith.constant 0 : i32
    %c0_i32_1 = arith.constant 0 : i32
    %4 = tpu.memref_slice %arg2[%3, %c0_i32_1] : memref<72x128xf32, #tpu.memory_space<any>> -> memref<1x128xf32, #tpu.memory_space<any>>
    %c0_i32_2 = arith.constant 0 : i32
    %c0_i32_3 = arith.constant 0 : i32
    %5 = tpu.memref_slice %arg4[%c0_i32_2, %c0_i32_3] : memref<8x128xf32, #tpu.memory_space<vmem>> -> memref<1x128xf32, #tpu.memory_space<vmem>>
    %6 = tpu.memref_slice %arg5[%c0_i32_0] : memref<8x!tpu.dma_semaphore, #tpu.memory_space<semaphore_mem>> -> memref<1x!tpu.dma_semaphore, #tpu.memory_space<semaphore_mem>>
    %7 = tpu.memref_squeeze %6 : memref<1x!tpu.dma_semaphore, #tpu.memory_space<semaphore_mem>> -> memref<!tpu.dma_semaphore, #tpu.memory_space<semaphore_mem>>
    tpu.enqueue_dma source(%4 : memref<1x128xf32, #tpu.memory_space<any>>) target(%5 : memref<1x128xf32, #tpu.memory_space<vmem>>) target_semaphore(%7 : memref<!tpu.dma_semaphore, #tpu.memory_space<semaphore_mem>>)
    %c1_i32 = arith.constant 1 : i32
    %8 = arith.addi %0, %c1_i32 : i32
    %9 = arith.index_cast %8 : i32 to index
    %10 = memref.load %arg1[%9] : memref<24xi32, #tpu.memory_space<smem>>
    %c1_i32_4 = arith.constant 1 : i32
    %c0_i32_5 = arith.constant 0 : i32
    %11 = tpu.memref_slice %arg2[%10, %c0_i32_5] : memref<72x128xf32, #tpu.memory_space<any>> -> memref<1x128xf32, #tpu.memory_space<any>>
    %c1_i32_6 = arith.constant 1 : i32
    %c0_i32_7 = arith.constant 0 : i32
    %12 = tpu.memref_slice %arg4[%c1_i32_6, %c0_i32_7] : memref<8x128xf32, #tpu.memory_space<vmem>> -> memref<1x128xf32, #tpu.memory_space<vmem>>
    %13 = tpu.memref_slice %arg5[%c1_i32_4] : memref<8x!tpu.dma_semaphore, #tpu.memory_space<semaphore_mem>> -> memref<1x!tpu.dma_semaphore, #tpu.memory_space<semaphore_mem>>
    %14 = tpu.memref_squeeze %13 : memref<1x!tpu.dma_semaphore, #tpu.memory_space<semaphore_mem>> -> memref<!tpu.dma_semaphore, #tpu.memory_space<semaphore_mem>>
    tpu.enqueue_dma source(%11 : memref<1x128xf32, #tpu.memory_space<any>>) target(%12 : memref<1x128xf32, #tpu.memory_space<vmem>>) target_semaphore(%14 : memref<!tpu.dma_semaphore, #tpu.memory_space<semaphore_mem>>)
    %c2_i32 = arith.constant 2 : i32
    %15 = arith.addi %0, %c2_i32 : i32
    %16 = arith.index_cast %15 : i32 to index
    %17 = memref.load %arg1[%16] : memref<24xi32, #tpu.memory_space<smem>>
    %c2_i32_8 = arith.constant 2 : i32
    %c0_i32_9 = arith.constant 0 : i32
    %18 = tpu.memref_slice %arg2[%17, %c0_i32_9] : memref<72x128xf32, #tpu.memory_space<any>> -> memref<1x128xf32, #tpu.memory_space<any>>
    %c2_i32_10 = arith.constant 2 : i32
    %c0_i32_11 = arith.constant 0 : i32
    %19 = tpu.memref_slice %arg4[%c2_i32_10, %c0_i32_11] : memref<8x128xf32, #tpu.memory_space<vmem>> -> memref<1x128xf32, #tpu.memory_space<vmem>>
    %20 = tpu.memref_slice %arg5[%c2_i32_8] : memref<8x!tpu.dma_semaphore, #tpu.memory_space<semaphore_mem>> -> memref<1x!tpu.dma_semaphore, #tpu.memory_space<semaphore_mem>>
    %21 = tpu.memref_squeeze %20 : memref<1x!tpu.dma_semaphore, #tpu.memory_space<semaphore_mem>> -> memref<!tpu.dma_semaphore, #tpu.memory_space<semaphore_mem>>
    tpu.enqueue_dma source(%18 : memref<1x128xf32, #tpu.memory_space<any>>) target(%19 : memref<1x128xf32, #tpu.memory_space<vmem>>) target_semaphore(%21 : memref<!tpu.dma_semaphore, #tpu.memory_space<semaphore_mem>>)
    %c3_i32 = arith.constant 3 : i32
    %22 = arith.addi %0, %c3_i32 : i32
    %23 = arith.index_cast %22 : i32 to index
    %24 = memref.load %arg1[%23] : memref<24xi32, #tpu.memory_space<smem>>
    %c3_i32_12 = arith.constant 3 : i32
    %c0_i32_13 = arith.constant 0 : i32
    %25 = tpu.memref_slice %arg2[%24, %c0_i32_13] : memref<72x128xf32, #tpu.memory_space<any>> -> memref<1x128xf32, #tpu.memory_space<any>>
    %c3_i32_14 = arith.constant 3 : i32
    %c0_i32_15 = arith.constant 0 : i32
    %26 = tpu.memref_slice %arg4[%c3_i32_14, %c0_i32_15] : memref<8x128xf32, #tpu.memory_space<vmem>> -> memref<1x128xf32, #tpu.memory_space<vmem>>
    %27 = tpu.memref_slice %arg5[%c3_i32_12] : memref<8x!tpu.dma_semaphore, #tpu.memory_space<semaphore_mem>> -> memref<1x!tpu.dma_semaphore, #tpu.memory_space<semaphore_mem>>
    %28 = tpu.memref_squeeze %27 : memref<1x!tpu.dma_semaphore, #tpu.memory_space<semaphore_mem>> -> memref<!tpu.dma_semaphore, #tpu.memory_space<semaphore_mem>>
    tpu.enqueue_dma source(%25 : memref<1x128xf32, #tpu.memory_space<any>>) target(%26 : memref<1x128xf32, #tpu.memory_space<vmem>>) target_semaphore(%28 : memref<!tpu.dma_semaphore, #tpu.memory_space<semaphore_mem>>)
    %c4_i32 = arith.constant 4 : i32
    %29 = arith.addi %0, %c4_i32 : i32
    %30 = arith.index_cast %29 : i32 to index
    %31 = memref.load %arg1[%30] : memref<24xi32, #tpu.memory_space<smem>>
    %c4_i32_16 = arith.constant 4 : i32
    %c0_i32_17 = arith.constant 0 : i32
    %32 = tpu.memref_slice %arg2[%31, %c0_i32_17] : memref<72x128xf32, #tpu.memory_space<any>> -> memref<1x128xf32, #tpu.memory_space<any>>
    %c4_i32_18 = arith.constant 4 : i32
    %c0_i32_19 = arith.constant 0 : i32
    %33 = tpu.memref_slice %arg4[%c4_i32_18, %c0_i32_19] : memref<8x128xf32, #tpu.memory_space<vmem>> -> memref<1x128xf32, #tpu.memory_space<vmem>>
    %34 = tpu.memref_slice %arg5[%c4_i32_16] : memref<8x!tpu.dma_semaphore, #tpu.memory_space<semaphore_mem>> -> memref<1x!tpu.dma_semaphore, #tpu.memory_space<semaphore_mem>>
    %35 = tpu.memref_squeeze %34 : memref<1x!tpu.dma_semaphore, #tpu.memory_space<semaphore_mem>> -> memref<!tpu.dma_semaphore, #tpu.memory_space<semaphore_mem>>
    tpu.enqueue_dma source(%32 : memref<1x128xf32, #tpu.memory_space<any>>) target(%33 : memref<1x128xf32, #tpu.memory_space<vmem>>) target_semaphore(%35 : memref<!tpu.dma_semaphore, #tpu.memory_space<semaphore_mem>>)
    %c5_i32 = arith.constant 5 : i32
    %36 = arith.addi %0, %c5_i32 : i32
    %37 = arith.index_cast %36 : i32 to index
    %38 = memref.load %arg1[%37] : memref<24xi32, #tpu.memory_space<smem>>
    %c5_i32_20 = arith.constant 5 : i32
    %c0_i32_21 = arith.constant 0 : i32
    %39 = tpu.memref_slice %arg2[%38, %c0_i32_21] : memref<72x128xf32, #tpu.memory_space<any>> -> memref<1x128xf32, #tpu.memory_space<any>>
    %c5_i32_22 = arith.constant 5 : i32
    %c0_i32_23 = arith.constant 0 : i32
    %40 = tpu.memref_slice %arg4[%c5_i32_22, %c0_i32_23] : memref<8x128xf32, #tpu.memory_space<vmem>> -> memref<1x128xf32, #tpu.memory_space<vmem>>
    %41 = tpu.memref_slice %arg5[%c5_i32_20] : memref<8x!tpu.dma_semaphore, #tpu.memory_space<semaphore_mem>> -> memref<1x!tpu.dma_semaphore, #tpu.memory_space<semaphore_mem>>
    %42 = tpu.memref_squeeze %41 : memref<1x!tpu.dma_semaphore, #tpu.memory_space<semaphore_mem>> -> memref<!tpu.dma_semaphore, #tpu.memory_space<semaphore_mem>>
    tpu.enqueue_dma source(%39 : memref<1x128xf32, #tpu.memory_space<any>>) target(%40 : memref<1x128xf32, #tpu.memory_space<vmem>>) target_semaphore(%42 : memref<!tpu.dma_semaphore, #tpu.memory_space<semaphore_mem>>)
    %c6_i32 = arith.constant 6 : i32
    %43 = arith.addi %0, %c6_i32 : i32
    %44 = arith.index_cast %43 : i32 to index
    %45 = memref.load %arg1[%44] : memref<24xi32, #tpu.memory_space<smem>>
    %c6_i32_24 = arith.constant 6 : i32
    %c0_i32_25 = arith.constant 0 : i32
    %46 = tpu.memref_slice %arg2[%45, %c0_i32_25] : memref<72x128xf32, #tpu.memory_space<any>> -> memref<1x128xf32, #tpu.memory_space<any>>
    %c6_i32_26 = arith.constant 6 : i32
    %c0_i32_27 = arith.constant 0 : i32
    %47 = tpu.memref_slice %arg4[%c6_i32_26, %c0_i32_27] : memref<8x128xf32, #tpu.memory_space<vmem>> -> memref<1x128xf32, #tpu.memory_space<vmem>>
    %48 = tpu.memref_slice %arg5[%c6_i32_24] : memref<8x!tpu.dma_semaphore, #tpu.memory_space<semaphore_mem>> -> memref<1x!tpu.dma_semaphore, #tpu.memory_space<semaphore_mem>>
    %49 = tpu.memref_squeeze %48 : memref<1x!tpu.dma_semaphore, #tpu.memory_space<semaphore_mem>> -> memref<!tpu.dma_semaphore, #tpu.memory_space<semaphore_mem>>
    tpu.enqueue_dma source(%46 : memref<1x128xf32, #tpu.memory_space<any>>) target(%47 : memref<1x128xf32, #tpu.memory_space<vmem>>) target_semaphore(%49 : memref<!tpu.dma_semaphore, #tpu.memory_space<semaphore_mem>>)
    %c7_i32 = arith.constant 7 : i32
    %50 = arith.addi %0, %c7_i32 : i32
    %51 = arith.index_cast %50 : i32 to index
    %52 = memref.load %arg1[%51] : memref<24xi32, #tpu.memory_space<smem>>
    %c7_i32_28 = arith.constant 7 : i32
    %c0_i32_29 = arith.constant 0 : i32
    %53 = tpu.memref_slice %arg2[%52, %c0_i32_29] : memref<72x128xf32, #tpu.memory_space<any>> -> memref<1x128xf32, #tpu.memory_space<any>>
    %c7_i32_30 = arith.constant 7 : i32
    %c0_i32_31 = arith.constant 0 : i32
    %54 = tpu.memref_slice %arg4[%c7_i32_30, %c0_i32_31] : memref<8x128xf32, #tpu.memory_space<vmem>> -> memref<1x128xf32, #tpu.memory_space<vmem>>
    %55 = tpu.memref_slice %arg5[%c7_i32_28] : memref<8x!tpu.dma_semaphore, #tpu.memory_space<semaphore_mem>> -> memref<1x!tpu.dma_semaphore, #tpu.memory_space<semaphore_mem>>
    %56 = tpu.memref_squeeze %55 : memref<1x!tpu.dma_semaphore, #tpu.memory_space<semaphore_mem>> -> memref<!tpu.dma_semaphore, #tpu.memory_space<semaphore_mem>>
    tpu.enqueue_dma source(%53 : memref<1x128xf32, #tpu.memory_space<any>>) target(%54 : memref<1x128xf32, #tpu.memory_space<vmem>>) target_semaphore(%56 : memref<!tpu.dma_semaphore, #tpu.memory_space<semaphore_mem>>)
    %c0_i32_32 = arith.constant 0 : i32
    %c0_i32_33 = arith.constant 0 : i32
    %57 = tpu.memref_slice %arg2[%3, %c0_i32_33] : memref<72x128xf32, #tpu.memory_space<any>> -> memref<1x128xf32, #tpu.memory_space<any>>
    %c0_i32_34 = arith.constant 0 : i32
    %c0_i32_35 = arith.constant 0 : i32
    %58 = tpu.memref_slice %arg4[%c0_i32_34, %c0_i32_35] : memref<8x128xf32, #tpu.memory_space<vmem>> -> memref<1x128xf32, #tpu.memory_space<vmem>>
    %59 = tpu.memref_slice %arg5[%c0_i32_32] : memref<8x!tpu.dma_semaphore, #tpu.memory_space<semaphore_mem>> -> memref<1x!tpu.dma_semaphore, #tpu.memory_space<semaphore_mem>>
    %60 = tpu.memref_squeeze %59 : memref<1x!tpu.dma_semaphore, #tpu.memory_space<semaphore_mem>> -> memref<!tpu.dma_semaphore, #tpu.memory_space<semaphore_mem>>
    tpu.wait_dma2 semaphore(%60 : memref<!tpu.dma_semaphore, #tpu.memory_space<semaphore_mem>>) src(%57 : memref<1x128xf32, #tpu.memory_space<any>>) dst(%58 : memref<1x128xf32, #tpu.memory_space<vmem>>)
    %c1_i32_36 = arith.constant 1 : i32
    %c0_i32_37 = arith.constant 0 : i32
    %61 = tpu.memref_slice %arg2[%10, %c0_i32_37] : memref<72x128xf32, #tpu.memory_space<any>> -> memref<1x128xf32, #tpu.memory_space<any>>
    %c1_i32_38 = arith.constant 1 : i32
    %c0_i32_39 = arith.constant 0 : i32
    %62 = tpu.memref_slice %arg4[%c1_i32_38, %c0_i32_39] : memref<8x128xf32, #tpu.memory_space<vmem>> -> memref<1x128xf32, #tpu.memory_space<vmem>>
    %63 = tpu.memref_slice %arg5[%c1_i32_36] : memref<8x!tpu.dma_semaphore, #tpu.memory_space<semaphore_mem>> -> memref<1x!tpu.dma_semaphore, #tpu.memory_space<semaphore_mem>>
    %64 = tpu.memref_squeeze %63 : memref<1x!tpu.dma_semaphore, #tpu.memory_space<semaphore_mem>> -> memref<!tpu.dma_semaphore, #tpu.memory_space<semaphore_mem>>
    tpu.wait_dma2 semaphore(%64 : memref<!tpu.dma_semaphore, #tpu.memory_space<semaphore_mem>>) src(%61 : memref<1x128xf32, #tpu.memory_space<any>>) dst(%62 : memref<1x128xf32, #tpu.memory_space<vmem>>)
    %c2_i32_40 = arith.constant 2 : i32
    %c0_i32_41 = arith.constant 0 : i32
    %65 = tpu.memref_slice %arg2[%17, %c0_i32_41] : memref<72x128xf32, #tpu.memory_space<any>> -> memref<1x128xf32, #tpu.memory_space<any>>
    %c2_i32_42 = arith.constant 2 : i32
    %c0_i32_43 = arith.constant 0 : i32
    %66 = tpu.memref_slice %arg4[%c2_i32_42, %c0_i32_43] : memref<8x128xf32, #tpu.memory_space<vmem>> -> memref<1x128xf32, #tpu.memory_space<vmem>>
    %67 = tpu.memref_slice %arg5[%c2_i32_40] : memref<8x!tpu.dma_semaphore, #tpu.memory_space<semaphore_mem>> -> memref<1x!tpu.dma_semaphore, #tpu.memory_space<semaphore_mem>>
    %68 = tpu.memref_squeeze %67 : memref<1x!tpu.dma_semaphore, #tpu.memory_space<semaphore_mem>> -> memref<!tpu.dma_semaphore, #tpu.memory_space<semaphore_mem>>
    tpu.wait_dma2 semaphore(%68 : memref<!tpu.dma_semaphore, #tpu.memory_space<semaphore_mem>>) src(%65 : memref<1x128xf32, #tpu.memory_space<any>>) dst(%66 : memref<1x128xf32, #tpu.memory_space<vmem>>)
    %c3_i32_44 = arith.constant 3 : i32
    %c0_i32_45 = arith.constant 0 : i32
    %69 = tpu.memref_slice %arg2[%24, %c0_i32_45] : memref<72x128xf32, #tpu.memory_space<any>> -> memref<1x128xf32, #tpu.memory_space<any>>
    %c3_i32_46 = arith.constant 3 : i32
    %c0_i32_47 = arith.constant 0 : i32
    %70 = tpu.memref_slice %arg4[%c3_i32_46, %c0_i32_47] : memref<8x128xf32, #tpu.memory_space<vmem>> -> memref<1x128xf32, #tpu.memory_space<vmem>>
    %71 = tpu.memref_slice %arg5[%c3_i32_44] : memref<8x!tpu.dma_semaphore, #tpu.memory_space<semaphore_mem>> -> memref<1x!tpu.dma_semaphore, #tpu.memory_space<semaphore_mem>>
    %72 = tpu.memref_squeeze %71 : memref<1x!tpu.dma_semaphore, #tpu.memory_space<semaphore_mem>> -> memref<!tpu.dma_semaphore, #tpu.memory_space<semaphore_mem>>
    tpu.wait_dma2 semaphore(%72 : memref<!tpu.dma_semaphore, #tpu.memory_space<semaphore_mem>>) src(%69 : memref<1x128xf32, #tpu.memory_space<any>>) dst(%70 : memref<1x128xf32, #tpu.memory_space<vmem>>)
    %c4_i32_48 = arith.constant 4 : i32
    %c0_i32_49 = arith.constant 0 : i32
    %73 = tpu.memref_slice %arg2[%31, %c0_i32_49] : memref<72x128xf32, #tpu.memory_space<any>> -> memref<1x128xf32, #tpu.memory_space<any>>
    %c4_i32_50 = arith.constant 4 : i32
    %c0_i32_51 = arith.constant 0 : i32
    %74 = tpu.memref_slice %arg4[%c4_i32_50, %c0_i32_51] : memref<8x128xf32, #tpu.memory_space<vmem>> -> memref<1x128xf32, #tpu.memory_space<vmem>>
    %75 = tpu.memref_slice %arg5[%c4_i32_48] : memref<8x!tpu.dma_semaphore, #tpu.memory_space<semaphore_mem>> -> memref<1x!tpu.dma_semaphore, #tpu.memory_space<semaphore_mem>>
    %76 = tpu.memref_squeeze %75 : memref<1x!tpu.dma_semaphore, #tpu.memory_space<semaphore_mem>> -> memref<!tpu.dma_semaphore, #tpu.memory_space<semaphore_mem>>
    tpu.wait_dma2 semaphore(%76 : memref<!tpu.dma_semaphore, #tpu.memory_space<semaphore_mem>>) src(%73 : memref<1x128xf32, #tpu.memory_space<any>>) dst(%74 : memref<1x128xf32, #tpu.memory_space<vmem>>)
    %c5_i32_52 = arith.constant 5 : i32
    %c0_i32_53 = arith.constant 0 : i32
    %77 = tpu.memref_slice %arg2[%38, %c0_i32_53] : memref<72x128xf32, #tpu.memory_space<any>> -> memref<1x128xf32, #tpu.memory_space<any>>
    %c5_i32_54 = arith.constant 5 : i32
    %c0_i32_55 = arith.constant 0 : i32
    %78 = tpu.memref_slice %arg4[%c5_i32_54, %c0_i32_55] : memref<8x128xf32, #tpu.memory_space<vmem>> -> memref<1x128xf32, #tpu.memory_space<vmem>>
    %79 = tpu.memref_slice %arg5[%c5_i32_52] : memref<8x!tpu.dma_semaphore, #tpu.memory_space<semaphore_mem>> -> memref<1x!tpu.dma_semaphore, #tpu.memory_space<semaphore_mem>>
    %80 = tpu.memref_squeeze %79 : memref<1x!tpu.dma_semaphore, #tpu.memory_space<semaphore_mem>> -> memref<!tpu.dma_semaphore, #tpu.memory_space<semaphore_mem>>
    tpu.wait_dma2 semaphore(%80 : memref<!tpu.dma_semaphore, #tpu.memory_space<semaphore_mem>>) src(%77 : memref<1x128xf32, #tpu.memory_space<any>>) dst(%78 : memref<1x128xf32, #tpu.memory_space<vmem>>)
    %c6_i32_56 = arith.constant 6 : i32
    %c0_i32_57 = arith.constant 0 : i32
    %81 = tpu.memref_slice %arg2[%45, %c0_i32_57] : memref<72x128xf32, #tpu.memory_space<any>> -> memref<1x128xf32, #tpu.memory_space<any>>
    %c6_i32_58 = arith.constant 6 : i32
    %c0_i32_59 = arith.constant 0 : i32
    %82 = tpu.memref_slice %arg4[%c6_i32_58, %c0_i32_59] : memref<8x128xf32, #tpu.memory_space<vmem>> -> memref<1x128xf32, #tpu.memory_space<vmem>>
    %83 = tpu.memref_slice %arg5[%c6_i32_56] : memref<8x!tpu.dma_semaphore, #tpu.memory_space<semaphore_mem>> -> memref<1x!tpu.dma_semaphore, #tpu.memory_space<semaphore_mem>>
    %84 = tpu.memref_squeeze %83 : memref<1x!tpu.dma_semaphore, #tpu.memory_space<semaphore_mem>> -> memref<!tpu.dma_semaphore, #tpu.memory_space<semaphore_mem>>
    tpu.wait_dma2 semaphore(%84 : memref<!tpu.dma_semaphore, #tpu.memory_space<semaphore_mem>>) src(%81 : memref<1x128xf32, #tpu.memory_space<any>>) dst(%82 : memref<1x128xf32, #tpu.memory_space<vmem>>)
    %c7_i32_60 = arith.constant 7 : i32
    %c0_i32_61 = arith.constant 0 : i32
    %85 = tpu.memref_slice %arg2[%52, %c0_i32_61] : memref<72x128xf32, #tpu.memory_space<any>> -> memref<1x128xf32, #tpu.memory_space<any>>
    %c7_i32_62 = arith.constant 7 : i32
    %c0_i32_63 = arith.constant 0 : i32
    %86 = tpu.memref_slice %arg4[%c7_i32_62, %c0_i32_63] : memref<8x128xf32, #tpu.memory_space<vmem>> -> memref<1x128xf32, #tpu.memory_space<vmem>>
    %87 = tpu.memref_slice %arg5[%c7_i32_60] : memref<8x!tpu.dma_semaphore, #tpu.memory_space<semaphore_mem>> -> memref<1x!tpu.dma_semaphore, #tpu.memory_space<semaphore_mem>>
    %88 = tpu.memref_squeeze %87 : memref<1x!tpu.dma_semaphore, #tpu.memory_space<semaphore_mem>> -> memref<!tpu.dma_semaphore, #tpu.memory_space<semaphore_mem>>
    tpu.wait_dma2 semaphore(%88 : memref<!tpu.dma_semaphore, #tpu.memory_space<semaphore_mem>>) src(%85 : memref<1x128xf32, #tpu.memory_space<any>>) dst(%86 : memref<1x128xf32, #tpu.memory_space<vmem>>)
    %c0 = arith.constant 0 : index
    %c0_64 = arith.constant 0 : index
    %89 = vector.load %arg4[%c0, %c0_64] : memref<8x128xf32, #tpu.memory_space<vmem>>, vector<8x128xf32>
    %c0_65 = arith.constant 0 : index
    %c0_66 = arith.constant 0 : index
    %90 = vector.load %arg3[%c0_65, %c0_66] : memref<8x128xf32, #tpu.memory_space<vmem>>, vector<8x128xf32>
    tpu.vector_store %arg3[%c0_65, %c0_66], %89 {strides = array<i32>} : memref<8x128xf32, #tpu.memory_space<vmem>>, vector<8x128xf32>,
    return
  }
  func.func @transform_1(%arg0: i32, %arg1: memref<24xi32, #tpu.memory_space<smem>>) -> (i32, i32) {
    %c0_i32 = arith.constant 0 : i32
    %c0_i32_0 = arith.constant 0 : i32
    return %arg0, %c0_i32 : i32, i32
  }
}

</mosaic_0001>

<llo_original>
// kernel: _fused_lookup.1
$region0: #{_fused_lookup.1}
  #allocation0 [shape = 'u32[]', space=smem, size = 0x4, offset = 0x4, fixed_abs, tag = 'smem constant byte address 0x4 - core index']
  #allocation1 [shape = 'u32[144,128]{1,0:T(1,128)}', space=vmem, size = 0x12000, scoped, tag = 'internal scratch']
  #allocation2 [shape = 'f32[8,128]{1,0:T(8,128)}', space=vmem, size = 0x1000, scoped, tag = 'scratch operand']
  #allocation3 [shape = 's32[8]{0}', space=sflag, size = 0x20, scoped, tag = 'scratch operand']
  #allocation4 [shape = 's32[1]{0}', space=sflag, size = 0x4, scoped, tag = 'scoped memory for _fused_lookup.1']
  #allocation5 [shape = 'u8[512]{0}', space=smem, size = 0x200, scoped, tag = 'prefetched SMEM operand 0']
  #allocation8 [shape = 's32[]', space=sflag, size = 0x4, offset = 0, fixed_abs, tag = 'sflag constant byte address 0x0 - dummy sync flag']
  #allocation9 [shape = 's32[]', space=sflag, size = 0x4, offset = 0, fixed_abs, tag = 'sflag constant byte address 0x0 - dummy sync flag']
  #allocation10 [shape = 'u32[]', space=smem, size = 0x4, offset = 0x44, fixed_abs, tag = 'smem constant byte address 0x44 - assertion arg 0']
  #allocation11 [shape = 'u32[]', space=smem, size = 0x4, offset = 0x48, fixed_abs, tag = 'smem constant byte address 0x48 - assertion arg 1']
  #allocation12 [shape = 's32[]', space=sflag, size = 0x4, offset = 0, fixed_abs, tag = 'sflag constant byte address 0x0 - dummy sync flag']
  #allocation13 [shape = 's32[]', space=sflag, size = 0x4, offset = 0, fixed_abs, tag = 'sflag constant byte address 0x0 - dummy sync flag']
  #allocation14 [shape = 's32[]', space=sflag, size = 0x4, offset = 0, fixed_abs, tag = 'sflag constant byte address 0x0 - dummy sync flag']
  #allocation15 [shape = 's32[]', space=sflag, size = 0x4, offset = 0, fixed_abs, tag = 'sflag constant byte address 0x0 - dummy sync flag']
  #allocation16 [shape = 's32[]', space=sflag, size = 0x4, offset = 0, fixed_abs, tag = 'sflag constant byte address 0x0 - dummy sync flag']
  #allocation17 [shape = 's32[]', space=sflag, size = 0x4, offset = 0, fixed_abs, tag = 'sflag constant byte address 0x0 - dummy sync flag']
  #allocation18 [shape = 's32[]', space=sflag, size = 0x4, offset = 0, fixed_abs, tag = 'sflag constant byte address 0x0 - dummy sync flag']
  #allocation19 [shape = 's32[]', space=sflag, size = 0x4, offset = 0, fixed_abs, tag = 'sflag constant byte address 0x0 - dummy sync flag']
  #allocation20 [shape = 's32[]', space=sflag, size = 0x4, offset = 0, fixed_abs, tag = 'sflag constant byte address 0x0 - dummy sync flag']
  #allocation21 [shape = 's32[]', space=sflag, size = 0x4, offset = 0, fixed_abs, tag = 'sflag constant byte address 0x0 - dummy sync flag']
  #allocation22 [shape = 's32[]', space=sflag, size = 0x4, offset = 0, fixed_abs, tag = 'sflag constant byte address 0x0 - dummy sync flag']
  #allocation23 [shape = 's32[]', space=sflag, size = 0x4, offset = 0, fixed_abs, tag = 'sflag constant byte address 0x0 - dummy sync flag']
  #allocation24 [shape = 's32[]', space=sflag, size = 0x4, offset = 0, fixed_abs, tag = 'sflag constant byte address 0x0 - dummy sync flag']
  #allocation25 [shape = 's32[]', space=sflag, size = 0x4, offset = 0, fixed_abs, tag = 'sflag constant byte address 0x0 - dummy sync flag']
  %s0 = inlined_call_operand.vmem [shape: s32[24], index: 0, kind: input, shape index: {}]
  %s1 = inlined_call_operand.hbm [shape: f32[72,128], index: 1, kind: input, shape index: {}]
  %s2 = inlined_call_operand.hbm [shape: f32[24,128], index: 2, kind: output, shape index: {}]
  %s3 = sld [smem:[#allocation0]]
  $region57: #{_fused_lookup.1} parent=0
    _
  %s5 = ssub.s32 1, %s3
  %s6 = scalar_select 0, %s5, %s3
  %s7 = sshll.u32 %s0, 4
  %s8 = int_to_ptr.vmem [resolvable:$true] %s7
  %10 = dma.vmem_to_smem %s8, 16, [#allocation5], [#allocation4]
  %11 = dma.done [#allocation4], 16
  %12 = sfence
  $region1: #{_fused_lookup.1} parent=0
    #allocation6 [shape = 'u8[8192]{0}', space=vmem, size = 0x2000, scoped, tag = 'output window, operand 0']
    #allocation7 [shape = 's32[2]{0}', space=sflag, size = 0x8, scoped, tag = 'scoped memory for _fused_lookup.1']
    %13 = vsyncpa [#allocation7], 0
    %s14 = scalar_lea.sflag [#allocation7], 1
    %15 = vsyncpa %s14, 0
    loop: start=0, step=1, limit=4
    $region2: #{_fused_lookup.1} parent=1 // loop_pre_header
      _
    $region3: #{_fused_lookup.1} parent=1 // loop_header
      %s17 = sphi 0, %s21
      %p18 = scmp.ge.s32.totalorder %s17, 4
      %s26 = sphi 0, %s28
      %s29 = sphi 0, %s26
      %s39 = sphi 0, %s29
    $region4: #{_fused_lookup.1} parent=1 // loop_header_branch
      %20 = sbr.rel (%p18) target = $region8
    $region5: #{_fused_lookup.1} parent=1 // loop_body
      %s22 = ssub.s32 %s17, 1
      %s23 = sadd.s32 %s17, 1
      %s24 = ssub.s32 %s17, %s23
      %p25 = scmp.eq.s32.totalorder %s24, 0
      %s27 = sadd.s32 %s26, 1
      %s28 = scalar_select %p25, %s26, %s27
      %p30 = pneg %p25
      %p31 = scmp.eq.s32.totalorder %s17, 2
      %p32 = por %p30, %p31
      %p33 = scmp.ne.s32.totalorder %s26, %s29
      %p34 = scmp.eq.s32.totalorder %s17, 0
      %p35 = por %p33, %p34
      %p36 = scmp.ne.s32.totalorder %s26, %s29
      %p37 = scmp.eq.s32.totalorder %s22, 2
      %p38 = por %p36, %p37
      %p40 = scmp.ne.s32.totalorder %s29, %s39
      %p41 = scmp.eq.s32.totalorder %s22, 0
      %p42 = por %p40, %p41
      %p43 = scmp.lt.s32.totalorder %s17, 3
      // Predicated region
      $region9: #{_fused_lookup.1} parent=5 // pred_check
        %p44 = pneg %p43
      $region10: #{_fused_lookup.1} parent=5 // pred_check_branch
        %46 = sbr.rel (%p44) target = $region12
      $region11: #{_fused_lookup.1} parent=5 // pred_region
        %p47 = pneg %p35
        %p48 = pneg %p32
        %s49 = sand.u32 %s26, 1
        %s50 = scalar_lea.sflag [#allocation7], %s49
        %s51 = sand.u32 %s26, 1
        %s52 = smul.addr %s51, 8
        %s53 = scalar_lea.vmem [#allocation6], %s52
        %s54 = smul.u32 %s17, 8
        %s55 = sld [smem:[#allocation5 + %s54]]
        %s56 = smul.addr %s55, 16
        %s57 = scalar_lea.hbm %s1, %s56
        // Predicated region
        $region13: #{_fused_lookup.1} parent=11 // pred_check
          _
        $region14: #{_fused_lookup.1} parent=11 // pred_check_branch
          %59 = sbr.rel target = $region16
        $region15: #{_fused_lookup.1} parent=11 // pred_region
          %60 = sst [smem:[#allocation10]] [#allocation9]
          %61 = sst [smem:[#allocation11]] [#allocation8]
        $region16: #{_fused_lookup.1} parent=11 // pred_fallthru
          _
        %63 = shalt.err (0)
        %s65 = sshll.u32 [#allocation2], 4
        %s66 = int_to_ptr.vmem [resolvable:$true] %s65
        %68 = dma.hbm_to_vmem [thread:$0]  %s57, 16, %s66, [#allocation3]
        %s69 = sadd.s32 %s54, 1
        %s70 = sld [smem:[#allocation5 + %s69]]
        %s71 = smul.addr %s70, 16
        %s72 = scalar_lea.hbm %s1, %s71
        %s73 = scalar_lea.vmem [#allocation2], 1
        %s74 = scalar_lea.sflag [#allocation3], 1
        // Predicated region
        $region17: #{_fused_lookup.1} parent=11 // pred_check
          _
        $region18: #{_fused_lookup.1} parent=11 // pred_check_branch
          %76 = sbr.rel target = $region20
        $region19: #{_fused_lookup.1} parent=11 // pred_region
          %77 = sst [smem:[#allocation10]] [#allocation13]
          %78 = sst [smem:[#allocation11]] [#allocation12]
        $region20: #{_fused_lookup.1} parent=11 // pred_fallthru
          _
        %80 = shalt.err (0)
        %s82 = sshll.u32 %s73, 4
        %s83 = int_to_ptr.vmem [resolvable:$true] %s82
        %85 = dma.hbm_to_vmem [thread:$0]  %s72, 16, %s83, %s74
        %s86 = sadd.s32 %s54, 2
        %s87 = sld [smem:[#allocation5 + %s86]]
        %s88 = smul.addr %s87, 16
        %s89 = scalar_lea.hbm %s1, %s88
        %s90 = scalar_lea.vmem [#allocation2], 2
        %s91 = scalar_lea.sflag [#allocation3], 2
        // Predicated region
        $region21: #{_fused_lookup.1} parent=11 // pred_check
          _
        $region22: #{_fused_lookup.1} parent=11 // pred_check_branch
          %93 = sbr.rel target = $region24
        $region23: #{_fused_lookup.1} parent=11 // pred_region
          %94 = sst [smem:[#allocation10]] [#allocation15]
          %95 = sst [smem:[#allocation11]] [#allocation14]
        $region24: #{_fused_lookup.1} parent=11 // pred_fallthru
          _
        %97 = shalt.err (0)
        %s99 = sshll.u32 %s90, 4
        %s100 = int_to_ptr.vmem [resolvable:$true] %s99
        %102 = dma.hbm_to_vmem [thread:$0]  %s89, 16, %s100, %s91
        %s103 = sadd.s32 %s54, 3
        %s104 = sld [smem:[#allocation5 + %s103]]
        %s105 = smul.addr %s104, 16
        %s106 = scalar_lea.hbm %s1, %s105
        %s107 = scalar_lea.vmem [#allocation2], 3
        %s108 = scalar_lea.sflag [#allocation3], 3
        // Predicated region
        $region25: #{_fused_lookup.1} parent=11 // pred_check
          _
        $region26: #{_fused_lookup.1} parent=11 // pred_check_branch
          %110 = sbr.rel target = $region28
        $region27: #{_fused_lookup.1} parent=11 // pred_region
          %111 = sst [smem:[#allocation10]] [#allocation17]
          %112 = sst [smem:[#allocation11]] [#allocation16]
        $region28: #{_fused_lookup.1} parent=11 // pred_fallthru
          _
        %114 = shalt.err (0)
        %s116 = sshll.u32 %s107, 4
        %s117 = int_to_ptr.vmem [resolvable:$true] %s116
        %119 = dma.hbm_to_vmem [thread:$0]  %s106, 16, %s117, %s108
        %s120 = sadd.s32 %s54, 4
        %s121 = sld [smem:[#allocation5 + %s120]]
        %s122 = smul.addr %s121, 16
        %s123 = scalar_lea.hbm %s1, %s122
        %s124 = scalar_lea.vmem [#allocation2], 4
        %s125 = scalar_lea.sflag [#allocation3], 4
        // Predicated region
        $region29: #{_fused_lookup.1} parent=11 // pred_check
          _
        $region30: #{_fused_lookup.1} parent=11 // pred_check_branch
          %127 = sbr.rel target = $region32
        $region31: #{_fused_lookup.1} parent=11 // pred_region
          %128 = sst [smem:[#allocation10]] [#allocation19]
          %129 = sst [smem:[#allocation11]] [#allocation18]
        $region32: #{_fused_lookup.1} parent=11 // pred_fallthru
          _
        %131 = shalt.err (0)
        %s133 = sshll.u32 %s124, 4
        %s134 = int_to_ptr.vmem [resolvable:$true] %s133
        %136 = dma.hbm_to_vmem [thread:$0]  %s123, 16, %s134, %s125
        %s137 = sadd.s32 %s54, 5
        %s138 = sld [smem:[#allocation5 + %s137]]
        %s139 = smul.addr %s138, 16
        %s140 = scalar_lea.hbm %s1, %s139
        %s141 = scalar_lea.vmem [#allocation2], 5
        %s142 = scalar_lea.sflag [#allocation3], 5
        // Predicated region
        $region33: #{_fused_lookup.1} parent=11 // pred_check
          _
        $region34: #{_fused_lookup.1} parent=11 // pred_check_branch
          %144 = sbr.rel target = $region36
        $region35: #{_fused_lookup.1} parent=11 // pred_region
          %145 = sst [smem:[#allocation10]] [#allocation21]
          %146 = sst [smem:[#allocation11]] [#allocation20]
        $region36: #{_fused_lookup.1} parent=11 // pred_fallthru
          _
        %148 = shalt.err (0)
        %s150 = sshll.u32 %s141, 4
        %s151 = int_to_ptr.vmem [resolvable:$true] %s150
        %153 = dma.hbm_to_vmem [thread:$0]  %s140, 16, %s151, %s142
        %s154 = sadd.s32 %s54, 6
        %s155 = sld [smem:[#allocation5 + %s154]]
        %s156 = smul.addr %s155, 16
        %s157 = scalar_lea.hbm %s1, %s156
        %s158 = scalar_lea.vmem [#allocation2], 6
        %s159 = scalar_lea.sflag [#allocation3], 6
        // Predicated region
        $region37: #{_fused_lookup.1} parent=11 // pred_check
          _
        $region38: #{_fused_lookup.1} parent=11 // pred_check_branch
          %161 = sbr.rel target = $region40
        $region39: #{_fused_lookup.1} parent=11 // pred_region
          %162 = sst [smem:[#allocation10]] [#allocation23]
          %163 = sst [smem:[#allocation11]] [#allocation22]
        $region40: #{_fused_lookup.1} parent=11 // pred_fallthru
          _
        %165 = shalt.err (0)
        %s167 = sshll.u32 %s158, 4
        %s168 = int_to_ptr.vmem [resolvable:$true] %s167
        %170 = dma.hbm_to_vmem [thread:$0]  %s157, 16, %s168, %s159
        %s171 = sadd.s32 %s54, 7
        %s172 = sld [smem:[#allocation5 + %s171]]
        %s173 = smul.addr %s172, 16
        %s174 = scalar_lea.hbm %s1, %s173
        %s175 = scalar_lea.vmem [#allocation2], 7
        %s176 = scalar_lea.sflag [#allocation3], 7
        // Predicated region
        $region41: #{_fused_lookup.1} parent=11 // pred_check
          _
        $region42: #{_fused_lookup.1} parent=11 // pred_check_branch
          %178 = sbr.rel target = $region44
        $region43: #{_fused_lookup.1} parent=11 // pred_region
          %179 = sst [smem:[#allocation10]] [#allocation25]
          %180 = sst [smem:[#allocation11]] [#allocation24]
        $region44: #{_fused_lookup.1} parent=11 // pred_fallthru
          _
        %182 = shalt.err (0)
        %s184 = sshll.u32 %s175, 4
        %s185 = int_to_ptr.vmem [resolvable:$true] %s184
        %187 = dma.hbm_to_vmem [thread:$0]  %s174, 16, %s185, %s176
        %s188 = smul.u32 1, 1
        %s189 = sshll.u32 %s188, 4
        %190 = dma.done [#allocation3], %s189
        %s191 = sshll.u32 %s188, 4
        %192 = dma.done %s74, %s191
        %s193 = sshll.u32 %s188, 4
        %194 = dma.done %s91, %s193
        %s195 = sshll.u32 %s188, 4
        %196 = dma.done %s108, %s195
        %s197 = sshll.u32 %s188, 4
        %198 = dma.done %s125, %s197
        %s199 = sshll.u32 %s188, 4
        %200 = dma.done %s142, %s199
        %s201 = sshll.u32 %s188, 4
        %202 = dma.done %s159, %s201
        %s203 = sshll.u32 %s188, 4
        %204 = dma.done %s176, %s203
        %v205 = vld [vmem:[#allocation2] sm:$0xff]
        %206 = vst [vmem:[%s53] sm:$0xff] %v205
        %s207 = sand.u32 %s26, 1
        %s208 = scalar_lea.sflag [#allocation7], %s207
        %s209 = sand.u32 %s26, 1
        %s210 = smul.addr %s209, 8
        %s211 = scalar_lea.vmem [#allocation6], %s210
        // Predicated region
        $region45: #{_fused_lookup.1} parent=11 // pred_check
          %p212 = pneg %p32
        $region46: #{_fused_lookup.1} parent=11 // pred_check_branch
          %214 = sbr.rel (%p212) target = $region48
        $region47: #{_fused_lookup.1} parent=11 // pred_region
          %s216 = ssub.s32 128, 128
          %217 = vsyncadd %s208, %s216
          %s218 = smul.addr %s17, 128
          %s219 = scalar_lea.hbm %s2, %s218
          %s221 = sshll.u32 %s211, 4
          %s222 = int_to_ptr.vmem [resolvable:$true] %s221
          %224 = dma.vmem_to_hbm [thread:$0]  %s222, 128, %s219, %s208
        $region48: #{_fused_lookup.1} parent=11 // pred_fallthru
          _
      $region12: #{_fused_lookup.1} parent=5 // pred_fallthru
        _
      %p225 = scmp.le.s32.totalorder 1, %s17
      // Predicated region
      $region49: #{_fused_lookup.1} parent=5 // pred_check
        %p226 = pneg %p225
      $region50: #{_fused_lookup.1} parent=5 // pred_check_branch
        %228 = sbr.rel (%p226) target = $region52
      $region51: #{_fused_lookup.1} parent=5 // pred_region
        %s229 = ssub.s32 %s17, 1
        // Predicated region
        $region53: #{_fused_lookup.1} parent=51 // pred_check
          %p230 = pneg %p38
        $region54: #{_fused_lookup.1} parent=51 // pred_check_branch
          %232 = sbr.rel (%p230) target = $region56
        $region55: #{_fused_lookup.1} parent=51 // pred_region
          %s233 = sand.u32 %s29, 1
          %s234 = scalar_lea.sflag [#allocation7], %s233
          %s235 = sand.u32 %s29, 1
          %s236 = smul.addr %s235, 8
          %s237 = scalar_lea.vmem [#allocation6], %s236
          %238 = dma.done %s234, 128
        $region56: #{_fused_lookup.1} parent=51 // pred_fallthru
          _
      $region52: #{_fused_lookup.1} parent=5 // pred_fallthru
        _
    $region6: #{_fused_lookup.1} parent=1 // loop_footer
      %s21 = sadd.s32 1, %s17
    $region7: #{_fused_lookup.1} parent=1 // loop_footer_branch
      %16 = sbr.rel target = $region3
    $region8: #{_fused_lookup.1} parent=1 // loop_exit
      _
    %239 = vsyncpa [#allocation7], 1
    %s240 = scalar_lea.sflag [#allocation7], 1
    %241 = vsyncpa %s240, 1
  %242 = vsyncmov [#allocation3]
  %s243 = vpop.sfrf %242
  %p244 = scmp.eq.s32.totalorder %s243, 0
  %p245 = pneg %p244
  %247 = shalt.err (%p245)
  %s248 = scalar_lea.sflag [#allocation3], 1
  %249 = vsyncmov %s248
  %s250 = vpop.sfrf %249
  %p251 = scmp.eq.s32.totalorder %s250, 0
  %p252 = pneg %p251
  %254 = shalt.err (%p252)
  %s255 = scalar_lea.sflag [#allocation3], 2
  %256 = vsyncmov %s255
  %s257 = vpop.sfrf %256
  %p258 = scmp.eq.s32.totalorder %s257, 0
  %p259 = pneg %p258
  %261 = shalt.err (%p259)
  %s262 = scalar_lea.sflag [#allocation3], 3
  %263 = vsyncmov %s262
  %s264 = vpop.sfrf %263
  %p265 = scmp.eq.s32.totalorder %s264, 0
  %p266 = pneg %p265
  %268 = shalt.err (%p266)
  %s269 = scalar_lea.sflag [#allocation3], 4
  %270 = vsyncmov %s269
  %s271 = vpop.sfrf %270
  %p272 = scmp.eq.s32.totalorder %s271, 0
  %p273 = pneg %p272
  %275 = shalt.err (%p273)
  %s276 = scalar_lea.sflag [#allocation3], 5
  %277 = vsyncmov %s276
  %s278 = vpop.sfrf %277
  %p279 = scmp.eq.s32.totalorder %s278, 0
  %p280 = pneg %p279
  %282 = shalt.err (%p280)
  %s283 = scalar_lea.sflag [#allocation3], 6
  %284 = vsyncmov %s283
  %s285 = vpop.sfrf %284
  %p286 = scmp.eq.s32.totalorder %s285, 0
  %p287 = pneg %p286
  %289 = shalt.err (%p287)
  %s290 = scalar_lea.sflag [#allocation3], 7
  %291 = vsyncmov %s290
  %s292 = vpop.sfrf %291
  %p293 = scmp.eq.s32.totalorder %s292, 0
  %p294 = pneg %p293
  %296 = shalt.err (%p294)

</llo_original>
